<compile_context>
chip_gen: v5e
topology: v5e:2x2
jax: 0.10.0
libtpu: 0.0.40
codegen_flags: <defaults>
</compile_context>

<pallas_src>
import functools

import jax
import jax.numpy as jnp
from jax.experimental import pallas as pl
from jax.experimental.pallas import tpu as pltpu


# ----------------------------------------------------------------------------
# In-kernel helpers
# ----------------------------------------------------------------------------
def _im2col(x, masks, *, k, dil, H, W):
    """im2col for a 'same' zero-padded (optionally dilated) KxK conv.

    x:     (C, L) float32, L = B*H*W (images flattened back-to-back on lanes).
    masks: (k*k, L) float32 0/1 validity masks, one row per tap.
    Returns (k*k*C, L); rows t*C..t*C+C-1 are the input shifted by tap t's
    offset (zeroed where the tap falls outside its image), ordered to match
    HWIO weights flattened as (Cout, kh*K*C + kw*C + c).
    """
    C, L = x.shape
    pad = dil * (k - 1) // 2
    pieces = []
    for kh in range(k):
        dh = kh * dil - pad
        for kw in range(k):
            dw = kw * dil - pad
            off = dh * W + dw
            if off == 0:
                shifted = x
            else:
                # Lane rotation on the XLU; wrapped positions are masked to 0.
                shifted = pltpu.roll(x, (-off) % L, axis=1)
            if dh == 0 and dw == 0:
                pieces.append(shifted)          # centre tap is always valid
            else:
                t = kh * k + kw
                pieces.append(shifted * masks[t:t + 1, :])
    return jnp.concatenate(pieces, axis=0)      # (k*k*C, L)


def _gru_init_kernel(x_ref, m_ref, w_ref, b_ref, out_ref, *, k, dil, H, W, C):
    # h is None branch:  h = sigmoid(conv_xz(x)) * tanh(conv_xn(x))
    xf = x_ref[...].astype(jnp.float32)                           # (Cin, L)
    px = _im2col(xf, m_ref[...], k=k, dil=dil, H=H, W=W)          # (k*k*Cin, L)
    g = jnp.dot(w_ref[...], px,
                preferred_element_type=jnp.float32) + b_ref[...]  # (2C, L)
    h = jax.nn.sigmoid(g[:C]) * jnp.tanh(g[C:])
    out_ref[...] = h.astype(out_ref.dtype)


def _gru_step_kernel(x_ref, h_ref, mx_ref, mh_ref,
                     wx_ref, wh_ref, wn_ref, bx_ref, bh_ref, bn_ref,
                     out_ref, *, k, dil, H, W, C):
    # h is not None branch (full GRU update)
    xf = x_ref[...].astype(jnp.float32)                           # (Cin, L)
    hf = h_ref[...].astype(jnp.float32)                           # (C,   L)

    # conv_xz | conv_xr | conv_xn fused: one im2col + one matmul.
    px = _im2col(xf, mx_ref[...], k=k, dil=dil, H=H, W=W)
    gx = jnp.dot(wx_ref[...], px,
                 preferred_element_type=jnp.float32) + bx_ref[...]  # (3C, L)

    # conv_hz | conv_hr fused.
    ph = _im2col(hf, mh_ref[...], k=k, dil=1, H=H, W=W)
    gh = jnp.dot(wh_ref[...], ph,
                 preferred_element_type=jnp.float32) + bh_ref[...]  # (2C, L)

    z = jax.nn.sigmoid(gx[:C] + gh[:C])
    r = jax.nn.sigmoid(gx[C:2 * C] + gh[C:])

    # conv_hn(r*h): same roll+mask im2col -- no zero-padded scratch buffer.
    pn = _im2col(r * hf, mh_ref[...], k=k, dil=1, H=H, W=W)
    hn = jnp.dot(wn_ref[...], pn,
                 preferred_element_type=jnp.float32) + bn_ref[...]  # (C, L)
    n = jnp.tanh(gx[2 * C:] + hn)

    out_ref[...] = ((1.0 - z) * hf + z * n).astype(out_ref.dtype)


# ----------------------------------------------------------------------------
# Wrapper-side glue (pure XLA: layout, weight fusion, masks)
# ----------------------------------------------------------------------------
def _fuse_weights(*ws):
    """HWIO (K,K,Cin,Cout_i) weights -> fused flat (sum Cout, K*K*Cin)."""
    w = jnp.concatenate(ws, axis=-1)
    kh, kw, cin, cout = w.shape
    return jnp.transpose(w, (3, 0, 1, 2)).reshape(cout, kh * kw * cin)


def _fuse_biases(*bs):
    """(1, Cout_i) biases -> (sum Cout, 1) column vector."""
    return jnp.concatenate(bs, axis=1).reshape(-1, 1)


def _tap_masks(k, dil, H, W, b_tile):
    """(k*k, b_tile*H*W) float32 0/1 validity mask per conv tap."""
    pad = dil * (k - 1) // 2
    ii = jnp.arange(H)[:, None]
    jj = jnp.arange(W)[None, :]
    rows = []
    for kh in range(k):
        dh = kh * dil - pad
        for kw in range(k):
            dw = kw * dil - pad
            ok = ((ii + dh >= 0) & (ii + dh < H)
                  & (jj + dw >= 0) & (jj + dw < W))
            rows.append(ok.reshape(-1))
    m = jnp.stack(rows).astype(jnp.float32)          # (k*k, H*W)
    return jnp.tile(m, (1, b_tile))                  # (k*k, b_tile*H*W)


def _to_lanes(a):
    """(N, C, H, W) -> lane-dense (C, N*H*W)."""
    n, c, h, w = a.shape
    return jnp.transpose(a, (1, 0, 2, 3)).reshape(c, n * h * w)


def rescan_gru(params, x, h=None, *, kernel_size=3, dilation=1, b_tile=8):
    """Pallas TPU implementation of RESCAN_GRU.forward.  x, h are NCHW."""
    N, Cin, H, W = x.shape
    C = params["wxz"].shape[-1]
    k = kernel_size
    HW = H * W

    # Batch tile: the flattened lane dim must be a multiple of 128, or the
    # block must cover the full (padded) batch.
    bt = min(b_tile, N)
    if (bt * HW) % 128 != 0:
        bt = N
    Npad = pl.cdiv(N, bt) * bt

    def pad_batch(a):
        return a if Npad == N else jnp.pad(
            a, ((0, Npad - N), (0, 0), (0, 0), (0, 0)))

    xf = _to_lanes(pad_batch(x))                     # (Cin, Npad*HW)
    L = bt * HW
    grid = (Npad // bt,)

    data_spec = lambda c: pl.BlockSpec((c, L), lambda nb: (0, nb))
    full_spec = lambda s: pl.BlockSpec(s, lambda nb: (0, 0))
    out_spec = pl.BlockSpec((C, L), lambda nb: (0, nb))
    out_shape = jax.ShapeDtypeStruct((C, Npad * HW), x.dtype)
    cparams = pltpu.CompilerParams(dimension_semantics=("parallel",))

    mask_x = _tap_masks(k, dilation, H, W, bt)

    if h is None:
        w = _fuse_weights(params["wxz"], params["wxn"])      # (2C, k*k*Cin)
        b = _fuse_biases(params["bxz"], params["bxn"])       # (2C, 1)
        kern = functools.partial(_gru_init_kernel, k=k, dil=dilation,
                                 H=H, W=W, C=C)
        out = pl.pallas_call(
            kern, out_shape=out_shape, grid=grid,
            in_specs=[data_spec(Cin), full_spec(mask_x.shape),
                      full_spec(w.shape), full_spec(b.shape)],
            out_specs=out_spec, compiler_params=cparams,
        )(xf, mask_x, w, b)
    else:
        hf = _to_lanes(pad_batch(h))                         # (C, Npad*HW)
        mask_h = _tap_masks(k, 1, H, W, bt)
        wx = _fuse_weights(params["wxz"], params["wxr"], params["wxn"])
        wh = _fuse_weights(params["whz"], params["whr"])
        wn = _fuse_weights(params["whn"])
        bx = _fuse_biases(params["bxz"], params["bxr"], params["bxn"])
        bh = _fuse_biases(params["bhz"], params["bhr"])
        bn = _fuse_biases(params["bhn"])
        kern = functools.partial(_gru_step_kernel, k=k, dil=dilation,
                                 H=H, W=W, C=C)
        out = pl.pallas_call(
            kern, out_shape=out_shape, grid=grid,
            in_specs=[data_spec(Cin), data_spec(C),
                      full_spec(mask_x.shape), full_spec(mask_h.shape),
                      full_spec(wx.shape), full_spec(wh.shape),
                      full_spec(wn.shape),
                      full_spec(bx.shape), full_spec(bh.shape),
                      full_spec(bn.shape)],
            out_specs=out_spec, compiler_params=cparams,
        )(xf, hf, mask_x, mask_h, wx, wh, wn, bx, bh, bn)

    out = out.reshape(C, Npad, H, W).transpose(1, 0, 2, 3)
    return out[:N]


# ----------------------------------------------------------------------------
# Pure-JAX reference (for correctness check only)
# ----------------------------------------------------------------------------
def _ref_conv(inp, w, b, pad, dil):
    out = jax.lax.conv_general_dilated(
        inp, w, window_strides=(1, 1),
        padding=[(pad, pad), (pad, pad)],
        rhs_dilation=(dil, dil),
        dimension_numbers=("NCHW", "HWIO", "NCHW"),
        precision=jax.lax.Precision.HIGHEST)
    return out + b.reshape(1, -1, 1, 1)


def ref_rescan_gru(params, x, h=None, *, kernel_size=3, dilation=1):
    k = kernel_size
    pad_x = dilation * (k - 1) // 2
    pad_h = (k - 1) // 2
    if h is None:
        z = jax.nn.sigmoid(_ref_conv(x, params["wxz"], params["bxz"], pad_x, dilation))
        f = jnp.tanh(_ref_conv(x, params["wxn"], params["bxn"], pad_x, dilation))
        return z * f
    z = jax.nn.sigmoid(_ref_conv(x, params["wxz"], params["bxz"], pad_x, dilation)
                       + _ref_conv(h, params["whz"], params["bhz"], pad_h, 1))
    r = jax.nn.sigmoid(_ref_conv(x, params["wxr"], params["bxr"], pad_x, dilation)
                       + _ref_conv(h, params["whr"], params["bhr"], pad_h, 1))
    n = jnp.tanh(_ref_conv(x, params["wxn"], params["bxn"], pad_x, dilation)
                 + _ref_conv(r * h, params["whn"], params["bhn"], pad_h, 1))
    return (1.0 - z) * h + z * n


# ----------------------------------------------------------------------------
# Parameter init + demo
# ----------------------------------------------------------------------------
def init_params(key, inp_dim, oup_dim, kernel_size):
    k = kernel_size
    names_x = ["wxz", "wxr", "wxn"]
    names_h = ["whz", "whr", "whn"]
    keys = jax.random.split(key, 12)
    params = {}
    for i, name in enumerate(names_x):
        params[name] = 0.1 * jax.random.normal(keys[i], (k, k, inp_dim, oup_dim),
                                               jnp.float32)
    for i, name in enumerate(names_h):
        params[name] = 0.1 * jax.random.normal(keys[3 + i], (k, k, oup_dim, oup_dim),
                                               jnp.float32)
    for i, name in enumerate(["bxz", "bxr", "bxn", "bhz", "bhr", "bhn"]):
        params[name] = 0.05 * jax.random.normal(keys[6 + i], (1, oup_dim),
                                                jnp.float32)
    return params


if __name__ == "__main__":
    inp_dim, oup_dim = 4, 8
    kernel_size, dilation = 3, 2
    N, H, W = 2, 16, 16

    key = jax.random.PRNGKey(0)
    kp, kx = jax.random.split(key)
    params = init_params(kp, inp_dim, oup_dim, kernel_size)
    x = jax.random.normal(kx, (N, inp_dim, H, W), jnp.float32)

    # branch 1: h is None
    h1 = rescan_gru(params, x, None, kernel_size=kernel_size, dilation=dilation)
    h1 = jax.block_until_ready(h1)
    # branch 2: recurrent step with the produced hidden state
    h2 = rescan_gru(params, x, h1, kernel_size=kernel_size, dilation=dilation)
    h2 = jax.block_until_ready(h2)

    # correctness check vs. pure-JAX reference
    h1_ref = ref_rescan_gru(params, x, None, kernel_size=kernel_size, dilation=dilation)
    h2_ref = ref_rescan_gru(params, x, h1_ref, kernel_size=kernel_size, dilation=dilation)
    assert jnp.allclose(h1, h1_ref, atol=2e-4, rtol=2e-4), "init branch mismatch"
    assert jnp.allclose(h2, h2_ref, atol=2e-4, rtol=2e-4), "step branch mismatch"

    print("KERNEL_OK")
</pallas_src>

<mosaic_0001>
module attributes {stable_mosaic.version = 11 : i64} {
  func.func @_gru_init_kernel(%arg0: i32, %arg1: memref<4x512xf32, #tpu.memory_space<vmem>>, %arg2: memref<9x512xf32, #tpu.memory_space<vmem>>, %arg3: memref<16x36xf32, #tpu.memory_space<vmem>>, %arg4: memref<16x1xf32, #tpu.memory_space<vmem>>, %arg5: memref<8x512xf32, #tpu.memory_space<vmem>>) attributes {dimension_semantics = [#tpu.dimension_semantics<parallel>], iteration_bounds = array<i64: 1>, scalar_prefetch = 0 : i64, scratch_operands = 0 : i64, tpu.core_type = #tpu.core_type<tc>, window_params = [{transform_indices = @transform_0, window_bounds = array<i64: 4, 512>}, {pipeline_mode = #tpu.pipeline_mode<synchronous>, transform_indices = @transform_1, window_bounds = array<i64: 9, 512>}, {pipeline_mode = #tpu.pipeline_mode<synchronous>, transform_indices = @transform_2, window_bounds = array<i64: 16, 36>}, {pipeline_mode = #tpu.pipeline_mode<synchronous>, transform_indices = @transform_3, window_bounds = array<i64: 16, 1>}, {transform_indices = @transform_4, window_bounds = array<i64: 8, 512>}]} {
    %c0 = arith.constant 0 : index
    %c0_0 = arith.constant 0 : index
    %0 = vector.load %arg1[%c0, %c0_0] : memref<4x512xf32, #tpu.memory_space<vmem>>, vector<4x512xf32>
    %c0_1 = arith.constant 0 : index
    %c0_2 = arith.constant 0 : index
    %1 = vector.load %arg2[%c0_1, %c0_2] : memref<9x512xf32, #tpu.memory_space<vmem>>, vector<9x512xf32>
    %c34_i32 = arith.constant 34 : i32
    %2 = tpu.dynamic_rotate %0 by %c34_i32 dim 1 : vector<4x512xf32>, i32 -> vector<4x512xf32>
    %3 = vector.extract_strided_slice %1 {offsets = [0, 0], sizes = [1, 512], strides = [1, 1]} : vector<9x512xf32> to vector<1x512xf32>
    %4 = vector.broadcast %3 : vector<1x512xf32> to vector<4x512xf32>
    %5 = arith.mulf %2, %4 : vector<4x512xf32>
    %c32_i32 = arith.constant 32 : i32
    %6 = tpu.dynamic_rotate %0 by %c32_i32 dim 1 : vector<4x512xf32>, i32 -> vector<4x512xf32>
    %7 = vector.extract_strided_slice %1 {offsets = [1, 0], sizes = [1, 512], strides = [1, 1]} : vector<9x512xf32> to vector<1x512xf32>
    %8 = vector.broadcast %7 : vector<1x512xf32> to vector<4x512xf32>
    %9 = arith.mulf %6, %8 : vector<4x512xf32>
    %c30_i32 = arith.constant 30 : i32
    %10 = tpu.dynamic_rotate %0 by %c30_i32 dim 1 : vector<4x512xf32>, i32 -> vector<4x512xf32>
    %11 = vector.extract_strided_slice %1 {offsets = [2, 0], sizes = [1, 512], strides = [1, 1]} : vector<9x512xf32> to vector<1x512xf32>
    %12 = vector.broadcast %11 : vector<1x512xf32> to vector<4x512xf32>
    %13 = arith.mulf %10, %12 : vector<4x512xf32>
    %c2_i32 = arith.constant 2 : i32
    %14 = tpu.dynamic_rotate %0 by %c2_i32 dim 1 : vector<4x512xf32>, i32 -> vector<4x512xf32>
    %15 = vector.extract_strided_slice %1 {offsets = [3, 0], sizes = [1, 512], strides = [1, 1]} : vector<9x512xf32> to vector<1x512xf32>
    %16 = vector.broadcast %15 : vector<1x512xf32> to vector<4x512xf32>
    %17 = arith.mulf %14, %16 : vector<4x512xf32>
    %c510_i32 = arith.constant 510 : i32
    %18 = tpu.dynamic_rotate %0 by %c510_i32 dim 1 : vector<4x512xf32>, i32 -> vector<4x512xf32>
    %19 = vector.extract_strided_slice %1 {offsets = [5, 0], sizes = [1, 512], strides = [1, 1]} : vector<9x512xf32> to vector<1x512xf32>
    %20 = vector.broadcast %19 : vector<1x512xf32> to vector<4x512xf32>
    %21 = arith.mulf %18, %20 : vector<4x512xf32>
    %c482_i32 = arith.constant 482 : i32
    %22 = tpu.dynamic_rotate %0 by %c482_i32 dim 1 : vector<4x512xf32>, i32 -> vector<4x512xf32>
    %23 = vector.extract_strided_slice %1 {offsets = [6, 0], sizes = [1, 512], strides = [1, 1]} : vector<9x512xf32> to vector<1x512xf32>
    %24 = vector.broadcast %23 : vector<1x512xf32> to vector<4x512xf32>
    %25 = arith.mulf %22, %24 : vector<4x512xf32>
    %c480_i32 = arith.constant 480 : i32
    %26 = tpu.dynamic_rotate %0 by %c480_i32 dim 1 : vector<4x512xf32>, i32 -> vector<4x512xf32>
    %27 = vector.extract_strided_slice %1 {offsets = [7, 0], sizes = [1, 512], strides = [1, 1]} : vector<9x512xf32> to vector<1x512xf32>
    %28 = vector.broadcast %27 : vector<1x512xf32> to vector<4x512xf32>
    %29 = arith.mulf %26, %28 : vector<4x512xf32>
    %c478_i32 = arith.constant 478 : i32
    %30 = tpu.dynamic_rotate %0 by %c478_i32 dim 1 : vector<4x512xf32>, i32 -> vector<4x512xf32>
    %31 = vector.extract_strided_slice %1 {offsets = [8, 0], sizes = [1, 512], strides = [1, 1]} : vector<9x512xf32> to vector<1x512xf32>
    %32 = vector.broadcast %31 : vector<1x512xf32> to vector<4x512xf32>
    %33 = arith.mulf %30, %32 : vector<4x512xf32>
    %34 = tpu.concatenate %5, %9, %13, %17, %0, %21, %25, %29, %33 in 0 : vector<4x512xf32>, vector<4x512xf32>, vector<4x512xf32>, vector<4x512xf32>, vector<4x512xf32>, vector<4x512xf32>, vector<4x512xf32>, vector<4x512xf32>, vector<4x512xf32> -> vector<36x512xf32>
    %c0_3 = arith.constant 0 : index
    %c0_4 = arith.constant 0 : index
    %35 = vector.load %arg3[%c0_3, %c0_4] : memref<16x36xf32, #tpu.memory_space<vmem>>, vector<16x36xf32>
    %cst = arith.constant dense<0.000000e+00> : vector<16x512xf32>
    %36 = tpu.matmul %35, %34, %cst {dimension_numbers = #tpu.dot_dimension_numbers<[1], [0], [0], [1], [0, 0, 1, 1], [], []>} : vector<16x36xf32>, vector<36x512xf32>, vector<16x512xf32> -> vector<16x512xf32>
    %c0_5 = arith.constant 0 : index
    %c0_6 = arith.constant 0 : index
    %37 = vector.load %arg4[%c0_5, %c0_6] : memref<16x1xf32, #tpu.memory_space<vmem>>, vector<16x1xf32>
    %38 = vector.broadcast %37 : vector<16x1xf32> to vector<16x512xf32>
    %39 = arith.addf %36, %38 : vector<16x512xf32>
    %40 = vector.extract_strided_slice %39 {offsets = [0, 0], sizes = [8, 512], strides = [1, 1]} : vector<16x512xf32> to vector<8x512xf32>
    %41 = arith.negf %40 : vector<8x512xf32>
    %42 = math.exp %41 : vector<8x512xf32>
    %cst_7 = arith.constant 1.000000e+00 : f32
    %43 = vector.broadcast %cst_7 : f32 to vector<8x512xf32>
    %44 = arith.addf %43, %42 : vector<8x512xf32>
    %45 = arith.divf %43, %44 : vector<8x512xf32>
    %46 = vector.extract_strided_slice %39 {offsets = [8, 0], sizes = [8, 512], strides = [1, 1]} : vector<16x512xf32> to vector<8x512xf32>
    %47 = math.tanh %46 : vector<8x512xf32>
    %48 = arith.mulf %45, %47 : vector<8x512xf32>
    %c0_8 = arith.constant 0 : index
    %c0_9 = arith.constant 0 : index
    %49 = vector.load %arg5[%c0_8, %c0_9] : memref<8x512xf32, #tpu.memory_space<vmem>>, vector<8x512xf32>
    tpu.vector_store %arg5[%c0_8, %c0_9], %48 {strides = array<i32>} : memref<8x512xf32, #tpu.memory_space<vmem>>, vector<8x512xf32>,
    return
  }
  func.func @transform_0(%arg0: i32) -> (i32, i32) {
    %c0_i32 = arith.constant 0 : i32
    %c0_i32_0 = arith.constant 0 : i32
    return %c0_i32, %arg0 : i32, i32
  }
  func.func @transform_1(%arg0: i32) -> (i32, i32) {
    %c0_i32 = arith.constant 0 : i32
    %c0_i32_0 = arith.constant 0 : i32
    %c0_i32_1 = arith.constant 0 : i32
    return %c0_i32, %c0_i32_0 : i32, i32
  }
  func.func @transform_2(%arg0: i32) -> (i32, i32) {
    %c0_i32 = arith.constant 0 : i32
    %c0_i32_0 = arith.constant 0 : i32
    %c0_i32_1 = arith.constant 0 : i32
    return %c0_i32, %c0_i32_0 : i32, i32
  }
  func.func @transform_3(%arg0: i32) -> (i32, i32) {
    %c0_i32 = arith.constant 0 : i32
    %c0_i32_0 = arith.constant 0 : i32
    %c0_i32_1 = arith.constant 0 : i32
    return %c0_i32, %c0_i32_0 : i32, i32
  }
  func.func @transform_4(%arg0: i32) -> (i32, i32) {
    %c0_i32 = arith.constant 0 : i32
    %c0_i32_0 = arith.constant 0 : i32
    return %c0_i32, %arg0 : i32, i32
  }
}

</mosaic_0001>

<llo_original>
// kernel: tpu_custom_call.1
$region0: #{tpu_custom_call.1}
  #allocation0 [shape = 'u32[]', space=smem, size = 0x4, offset = 0x4, fixed_abs, tag = 'smem constant byte address 0x4 - core index']
  #allocation1 [shape = 'u32[72,128]{1,0:T(1,128)}', space=vmem, size = 0x9000, scoped, tag = 'internal scratch']
  %s0 = inlined_call_operand.vmem [shape: f32[4,512], index: 0, kind: input, shape index: {}]
  %s1 = inlined_call_operand.hbm [shape: f32[9,512], index: 1, kind: input, shape index: {}]
  %s2 = inlined_call_operand.hbm [shape: f32[16,36], index: 2, kind: input, shape index: {}]
  %s3 = inlined_call_operand.vmem [shape: f32[16,1], index: 3, kind: input, shape index: {}]
  %s4 = inlined_call_operand.hbm [shape: f32[8,512], index: 4, kind: output, shape index: {}]
  %s5 = sld [smem:[#allocation0]]
  $region34: #{tpu_custom_call.1} parent=0
    _
  %s7 = ssub.s32 1, %s5
  %s8 = scalar_select 0, %s7, %s5
  $region1: #{tpu_custom_call.1} parent=0
    #allocation2 [shape = 'u8[32768]{0}', space=vmem, size = 0x8000, scoped, tag = 'input window, operand 1, single buffered']
    #allocation3 [shape = 's32[1]{0}', space=sflag, size = 0x4, scoped, tag = 'scoped memory for tpu_custom_call.1']
    #allocation4 [shape = 's32[1]{0}', space=sflag, size = 0x4, scoped, tag = 'scoped memory for tpu_custom_call.1']
    #allocation5 [shape = 'u8[8192]{0}', space=vmem, size = 0x2000, scoped, tag = 'input window, operand 2, single buffered']
    #allocation6 [shape = 's32[1]{0}', space=sflag, size = 0x4, scoped, tag = 'scoped memory for tpu_custom_call.1']
    #allocation7 [shape = 'u8[16384]{0}', space=vmem, size = 0x4000, scoped, tag = 'output window, operand 0, single buffered']
    %9 = vsyncpa [#allocation3], 0
    %10 = vsyncpa [#allocation6], 0
    %11 = vsyncpa [#allocation4], 0
    // Predicated region
    $region2: #{tpu_custom_call.1} parent=1 // pred_check
      _
    $region3: #{tpu_custom_call.1} parent=1 // pred_check_branch
      %13 = sbr.rel (0) target = $region5
    $region4: #{tpu_custom_call.1} parent=1 // pred_region
      _
    $region5: #{tpu_custom_call.1} parent=1 // pred_fallthru
      _
    // Predicated region
    $region6: #{tpu_custom_call.1} parent=1 // pred_check
      _
    $region7: #{tpu_custom_call.1} parent=1 // pred_check_branch
      %15 = sbr.rel (0) target = $region9
    $region8: #{tpu_custom_call.1} parent=1 // pred_region
      %17 = vsyncadd [#allocation3], 0
      %s18 = sshll.u32 %s1, 4
      %s19 = int_to_ptr.hbm [resolvable:$true] %s18
      %s20 = sshll.u32 [#allocation2], 4
      %s21 = int_to_ptr.vmem [resolvable:$true] %s20
      %26 = dma.hbm_to_vmem [thread:$0]  %s19, 1024, %s21, [#allocation3], 512, 512, 32
    $region9: #{tpu_custom_call.1} parent=1 // pred_fallthru
      _
    // Predicated region
    $region10: #{tpu_custom_call.1} parent=1 // pred_check
      _
    $region11: #{tpu_custom_call.1} parent=1 // pred_check_branch
      %28 = sbr.rel (0) target = $region13
    $region12: #{tpu_custom_call.1} parent=1 // pred_region
      %30 = vsyncadd [#allocation6], 0
      %s31 = sshll.u32 %s2, 4
      %s32 = int_to_ptr.hbm [resolvable:$true] %s31
      %s33 = sshll.u32 [#allocation5], 4
      %s34 = int_to_ptr.vmem [resolvable:$true] %s33
      %39 = dma.hbm_to_vmem [thread:$0]  %s32, 256, %s34, [#allocation6], 128, 128, 8
    $region13: #{tpu_custom_call.1} parent=1 // pred_fallthru
      _
    // Predicated region
    $region14: #{tpu_custom_call.1} parent=1 // pred_check
      _
    $region15: #{tpu_custom_call.1} parent=1 // pred_check_branch
      %41 = sbr.rel (0) target = $region17
    $region16: #{tpu_custom_call.1} parent=1 // pred_region
      _
    $region17: #{tpu_custom_call.1} parent=1 // pred_fallthru
      _
    // Predicated region
    $region18: #{tpu_custom_call.1} parent=1 // pred_check
      _
    $region19: #{tpu_custom_call.1} parent=1 // pred_check_branch
      %43 = sbr.rel (0) target = $region21
    $region20: #{tpu_custom_call.1} parent=1 // pred_region
      %45 = dma.done [#allocation3], 1024
    $region21: #{tpu_custom_call.1} parent=1 // pred_fallthru
      _
    // Predicated region
    $region22: #{tpu_custom_call.1} parent=1 // pred_check
      _
    $region23: #{tpu_custom_call.1} parent=1 // pred_check_branch
      %47 = sbr.rel (0) target = $region25
    $region24: #{tpu_custom_call.1} parent=1 // pred_region
      %49 = dma.done [#allocation6], 256
    $region25: #{tpu_custom_call.1} parent=1 // pred_fallthru
      _
    %v50 = vld [vmem:[%s0] sm:$0xff]
    %v51 = vld [vmem:[%s0 + $0x8] sm:$0xff]
    %v52 = vld [vmem:[#allocation2] sm:$0xff]
    %v53 = vld [vmem:[#allocation2 + $0x8] sm:$0xff]
    %v54 = vld [vmem:[#allocation2 + $0x10] sm:$0xff]
    %v55 = vld [vmem:[#allocation2 + $0x18] sm:$0xff]
    %v56 = vld [vmem:[#allocation2 + $0x20] sm:$0x1]
    %v57 = vld [vmem:[#allocation2 + $0x28] sm:$0x1]
    %v58 = vld [vmem:[#allocation2 + $0x30] sm:$0x1]
    %v59 = vld [vmem:[#allocation2 + $0x38] sm:$0x1]
    %62 = vst [vmem:[#allocation1] ss:$2 sm:$0xff] %v50
    %s63 = scalar_lea.vmem [#allocation1], 16
    %64 = vst [vmem:[%s63] ss:$2 sm:$0xff] %v51
    %v65 = vld.sshfl [vmem:[#allocation1] sm:$0xff pattern:$0x75316420]
    %v66 = vld.sshfl [vmem:[#allocation1 + $0x8] sm:$0xff pattern:$0x75316420]
    %v67 = vld.sshfl [vmem:[#allocation1 + $0x10] sm:$0xff pattern:$0x75316420]
    %v68 = vld.sshfl [vmem:[#allocation1 + $0x18] sm:$0xff pattern:$0x75316420]
    %73 = vrot.lane.b32.xlu0 %v65, 34
    %v74 = vpop.permute.xlu0 %73
    %75 = vrot.lane.b32.xlu0 %v66, 34
    %v76 = vpop.permute.xlu0 %75
    %77 = vrot.lane.b32.xlu0 %v67, 34
    %v78 = vpop.permute.xlu0 %77
    %79 = vrot.lane.b32.xlu0 %v68, 34
    %v80 = vpop.permute.xlu0 %79
    %v81 = vlaneseq
    %v82 = vand.u32 %v81, 127
    %vm83 = vcmp.lt.s32.totalorder %v82, 34
    %v84 = vsel %vm83, %v78, %v80
    %v85 = vsel %vm83, %v76, %v78
    %v86 = vsel %vm83, %v74, %v76
    %v87 = vsel %vm83, %v80, %v74
    %v88 = vperm.slane %v52, 0
    %v89 = vperm.slane %v53, 0
    %v90 = vperm.slane %v54, 0
    %v91 = vperm.slane %v55, 0
    %v92 = vmul.f32 %v87, %v88
    %v93 = vmul.f32 %v86, %v89
    %v94 = vmul.f32 %v85, %v90
    %v95 = vmul.f32 %v84, %v91
    %96 = vst [vmem:[#allocation1] ss:$2 sm:$0xff] %v50
    %s97 = scalar_lea.vmem [#allocation1], 16
    %98 = vst [vmem:[%s97] ss:$2 sm:$0xff] %v51
    %v99 = vld.sshfl [vmem:[#allocation1] sm:$0xff pattern:$0x75316420]
    %v100 = vld.sshfl [vmem:[#allocation1 + $0x8] sm:$0xff pattern:$0x75316420]
    %v101 = vld.sshfl [vmem:[#allocation1 + $0x10] sm:$0xff pattern:$0x75316420]
    %v102 = vld.sshfl [vmem:[#allocation1 + $0x18] sm:$0xff pattern:$0x75316420]
    %107 = vrot.lane.b32.xlu0 %v99, 32
    %v108 = vpop.permute.xlu0 %107
    %109 = vrot.lane.b32.xlu0 %v100, 32
    %v110 = vpop.permute.xlu0 %109
    %111 = vrot.lane.b32.xlu0 %v101, 32
    %v112 = vpop.permute.xlu0 %111
    %113 = vrot.lane.b32.xlu0 %v102, 32
    %v114 = vpop.permute.xlu0 %113
    %vm115 = vcmp.lt.s32.totalorder %v82, 32
    %v116 = vsel %vm115, %v112, %v114
    %v117 = vsel %vm115, %v110, %v112
    %v118 = vsel %vm115, %v108, %v110
    %v119 = vsel %vm115, %v114, %v108
    %v120 = vperm.slane %v52, 1
    %v121 = vperm.slane %v53, 1
    %v122 = vperm.slane %v54, 1
    %v123 = vperm.slane %v55, 1
    %v124 = vmul.f32 %v119, %v120
    %v125 = vmul.f32 %v118, %v121
    %v126 = vmul.f32 %v117, %v122
    %v127 = vmul.f32 %v116, %v123
    %128 = vst [vmem:[#allocation1] ss:$2 sm:$0xff] %v50
    %s129 = scalar_lea.vmem [#allocation1], 16
    %130 = vst [vmem:[%s129] ss:$2 sm:$0xff] %v51
    %v131 = vld.sshfl [vmem:[#allocation1] sm:$0xff pattern:$0x75316420]
    %v132 = vld.sshfl [vmem:[#allocation1 + $0x8] sm:$0xff pattern:$0x75316420]
    %v133 = vld.sshfl [vmem:[#allocation1 + $0x10] sm:$0xff pattern:$0x75316420]
    %v134 = vld.sshfl [vmem:[#allocation1 + $0x18] sm:$0xff pattern:$0x75316420]
    %139 = vrot.lane.b32.xlu0 %v131, 30
    %v140 = vpop.permute.xlu0 %139
    %141 = vrot.lane.b32.xlu0 %v132, 30
    %v142 = vpop.permute.xlu0 %141
    %143 = vrot.lane.b32.xlu0 %v133, 30
    %v144 = vpop.permute.xlu0 %143
    %145 = vrot.lane.b32.xlu0 %v134, 30
    %v146 = vpop.permute.xlu0 %145
    %vm147 = vcmp.lt.s32.totalorder %v82, 30
    %v148 = vsel %vm147, %v144, %v146
    %v149 = vsel %vm147, %v142, %v144
    %v150 = vsel %vm147, %v140, %v142
    %v151 = vsel %vm147, %v146, %v140
    %v152 = vperm.slane %v52, 2
    %v153 = vperm.slane %v53, 2
    %v154 = vperm.slane %v54, 2
    %v155 = vperm.slane %v55, 2
    %v156 = vmul.f32 %v151, %v152
    %v157 = vmul.f32 %v150, %v153
    %v158 = vmul.f32 %v149, %v154
    %v159 = vmul.f32 %v148, %v155
    %160 = vst [vmem:[#allocation1] ss:$2 sm:$0xff] %v50
    %s161 = scalar_lea.vmem [#allocation1], 16
    %162 = vst [vmem:[%s161] ss:$2 sm:$0xff] %v51
    %v163 = vld.sshfl [vmem:[#allocation1] sm:$0xff pattern:$0x75316420]
    %v164 = vld.sshfl [vmem:[#allocation1 + $0x8] sm:$0xff pattern:$0x75316420]
    %v165 = vld.sshfl [vmem:[#allocation1 + $0x10] sm:$0xff pattern:$0x75316420]
    %v166 = vld.sshfl [vmem:[#allocation1 + $0x18] sm:$0xff pattern:$0x75316420]
    %171 = vrot.lane.b32.xlu0 %v163, 2
    %v172 = vpop.permute.xlu0 %171
    %173 = vrot.lane.b32.xlu0 %v164, 2
    %v174 = vpop.permute.xlu0 %173
    %175 = vrot.lane.b32.xlu0 %v165, 2
    %v176 = vpop.permute.xlu0 %175
    %177 = vrot.lane.b32.xlu0 %v166, 2
    %v178 = vpop.permute.xlu0 %177
    %vm179 = vcmp.lt.s32.totalorder %v82, 2
    %v180 = vsel %vm179, %v176, %v178
    %v181 = vsel %vm179, %v174, %v176
    %v182 = vsel %vm179, %v172, %v174
    %v183 = vsel %vm179, %v178, %v172
    %v184 = vperm.slane %v52, 3
    %v185 = vperm.slane %v53, 3
    %v186 = vperm.slane %v54, 3
    %v187 = vperm.slane %v55, 3
    %v188 = vmul.f32 %v183, %v184
    %v189 = vmul.f32 %v182, %v185
    %v190 = vmul.f32 %v181, %v186
    %v191 = vmul.f32 %v180, %v187
    %192 = vst [vmem:[#allocation1] ss:$2 sm:$0xff] %v50
    %s193 = scalar_lea.vmem [#allocation1], 16
    %194 = vst [vmem:[%s193] ss:$2 sm:$0xff] %v51
    %v195 = vld.sshfl [vmem:[#allocation1] sm:$0xff pattern:$0x75316420]
    %v196 = vld.sshfl [vmem:[#allocation1 + $0x8] sm:$0xff pattern:$0x75316420]
    %v197 = vld.sshfl [vmem:[#allocation1 + $0x10] sm:$0xff pattern:$0x75316420]
    %v198 = vld.sshfl [vmem:[#allocation1 + $0x18] sm:$0xff pattern:$0x75316420]
    %203 = vrot.lane.b32.xlu0 %v195, 126
    %v204 = vpop.permute.xlu0 %203
    %205 = vrot.lane.b32.xlu0 %v196, 126
    %v206 = vpop.permute.xlu0 %205
    %207 = vrot.lane.b32.xlu0 %v197, 126
    %v208 = vpop.permute.xlu0 %207
    %209 = vrot.lane.b32.xlu0 %v198, 126
    %v210 = vpop.permute.xlu0 %209
    %vm211 = vcmp.lt.s32.totalorder %v82, 126
    %v212 = vsel %vm211, %v208, %v210
    %v213 = vsel %vm211, %v206, %v208
    %v214 = vsel %vm211, %v204, %v206
    %v215 = vsel %vm211, %v210, %v204
    %v216 = vperm.slane %v52, 5
    %v217 = vperm.slane %v53, 5
    %v218 = vperm.slane %v54, 5
    %v219 = vperm.slane %v55, 5
    %v220 = vmul.f32 %v214, %v216
    %v221 = vmul.f32 %v213, %v217
    %v222 = vmul.f32 %v212, %v218
    %v223 = vmul.f32 %v215, %v219
    %224 = vst [vmem:[#allocation1] ss:$2 sm:$0xff] %v50
    %s225 = scalar_lea.vmem [#allocation1], 16
    %226 = vst [vmem:[%s225] ss:$2 sm:$0xff] %v51
    %v227 = vld.sshfl [vmem:[#allocation1] sm:$0xff pattern:$0x75316420]
    %v228 = vld.sshfl [vmem:[#allocation1 + $0x8] sm:$0xff pattern:$0x75316420]
    %v229 = vld.sshfl [vmem:[#allocation1 + $0x10] sm:$0xff pattern:$0x75316420]
    %v230 = vld.sshfl [vmem:[#allocation1 + $0x18] sm:$0xff pattern:$0x75316420]
    %235 = vrot.lane.b32.xlu0 %v227, 98
    %v236 = vpop.permute.xlu0 %235
    %237 = vrot.lane.b32.xlu0 %v228, 98
    %v238 = vpop.permute.xlu0 %237
    %239 = vrot.lane.b32.xlu0 %v229, 98
    %v240 = vpop.permute.xlu0 %239
    %241 = vrot.lane.b32.xlu0 %v230, 98
    %v242 = vpop.permute.xlu0 %241
    %vm243 = vcmp.lt.s32.totalorder %v82, 98
    %v244 = vsel %vm243, %v240, %v242
    %v245 = vsel %vm243, %v238, %v240
    %v246 = vsel %vm243, %v236, %v238
    %v247 = vsel %vm243, %v242, %v236
    %v248 = vperm.slane %v52, 6
    %v249 = vperm.slane %v53, 6
    %v250 = vperm.slane %v54, 6
    %v251 = vperm.slane %v55, 6
    %v252 = vmul.f32 %v246, %v248
    %v253 = vmul.f32 %v245, %v249
    %v254 = vmul.f32 %v244, %v250
    %v255 = vmul.f32 %v247, %v251
    %256 = vst [vmem:[#allocation1] ss:$2 sm:$0xff] %v50
    %s257 = scalar_lea.vmem [#allocation1], 16
    %258 = vst [vmem:[%s257] ss:$2 sm:$0xff] %v51
    %v259 = vld.sshfl [vmem:[#allocation1] sm:$0xff pattern:$0x75316420]
    %v260 = vld.sshfl [vmem:[#allocation1 + $0x8] sm:$0xff pattern:$0x75316420]
    %v261 = vld.sshfl [vmem:[#allocation1 + $0x10] sm:$0xff pattern:$0x75316420]
    %v262 = vld.sshfl [vmem:[#allocation1 + $0x18] sm:$0xff pattern:$0x75316420]
    %267 = vrot.lane.b32.xlu0 %v259, 96
    %v268 = vpop.permute.xlu0 %267
    %269 = vrot.lane.b32.xlu0 %v260, 96
    %v270 = vpop.permute.xlu0 %269
    %271 = vrot.lane.b32.xlu0 %v261, 96
    %v272 = vpop.permute.xlu0 %271
    %273 = vrot.lane.b32.xlu0 %v262, 96
    %v274 = vpop.permute.xlu0 %273
    %vm275 = vcmp.lt.s32.totalorder %v82, 96
    %v276 = vsel %vm275, %v272, %v274
    %v277 = vsel %vm275, %v270, %v272
    %v278 = vsel %vm275, %v268, %v270
    %v279 = vsel %vm275, %v274, %v268
    %v280 = vperm.slane %v52, 7
    %v281 = vperm.slane %v53, 7
    %v282 = vperm.slane %v54, 7
    %v283 = vperm.slane %v55, 7
    %v284 = vmul.f32 %v278, %v280
    %v285 = vmul.f32 %v277, %v281
    %v286 = vmul.f32 %v276, %v282
    %v287 = vmul.f32 %v279, %v283
    %288 = vst [vmem:[#allocation1] ss:$2 sm:$0xff] %v50
    %s289 = scalar_lea.vmem [#allocation1], 16
    %290 = vst [vmem:[%s289] ss:$2 sm:$0xff] %v51
    %v291 = vld.sshfl [vmem:[#allocation1] sm:$0xff pattern:$0x75316420]
    %v292 = vld.sshfl [vmem:[#allocation1 + $0x8] sm:$0xff pattern:$0x75316420]
    %v293 = vld.sshfl [vmem:[#allocation1 + $0x10] sm:$0xff pattern:$0x75316420]
    %v294 = vld.sshfl [vmem:[#allocation1 + $0x18] sm:$0xff pattern:$0x75316420]
    %299 = vrot.lane.b32.xlu0 %v291, 94
    %v300 = vpop.permute.xlu0 %299
    %301 = vrot.lane.b32.xlu0 %v292, 94
    %v302 = vpop.permute.xlu0 %301
    %303 = vrot.lane.b32.xlu0 %v293, 94
    %v304 = vpop.permute.xlu0 %303
    %305 = vrot.lane.b32.xlu0 %v294, 94
    %v306 = vpop.permute.xlu0 %305
    %vm307 = vcmp.lt.s32.totalorder %v82, 94
    %v308 = vsel %vm307, %v304, %v306
    %v309 = vsel %vm307, %v302, %v304
    %v310 = vsel %vm307, %v300, %v302
    %v311 = vsel %vm307, %v306, %v300
    %v312 = vperm.slane %v56, 0
    %v313 = vperm.slane %v57, 0
    %v314 = vperm.slane %v58, 0
    %v315 = vperm.slane %v59, 0
    %v316 = vmul.f32 %v310, %v312
    %v317 = vmul.f32 %v309, %v313
    %v318 = vmul.f32 %v308, %v314
    %v319 = vmul.f32 %v311, %v315
    %v324 = vrot.slane %v124, 4
    %v325 = vrot.slane %v125, 4
    %v326 = vrot.slane %v126, 4
    %v327 = vrot.slane %v127, 4
    %v336 = vrot.slane %v188, 4
    %v337 = vrot.slane %v189, 4
    %v338 = vrot.slane %v190, 4
    %v339 = vrot.slane %v191, 4
    %344 = vst [vmem:[#allocation1] ss:$2 sm:$0xff] %v50
    %s345 = scalar_lea.vmem [#allocation1], 16
    %346 = vst [vmem:[%s345] ss:$2 sm:$0xff] %v51
    %v347 = vld.sshfl [vmem:[#allocation1] sm:$0xff pattern:$0x75316420]
    %v348 = vld.sshfl [vmem:[#allocation1 + $0x8] sm:$0xff pattern:$0x75316420]
    %v349 = vld.sshfl [vmem:[#allocation1 + $0x10] sm:$0xff pattern:$0x75316420]
    %v350 = vld.sshfl [vmem:[#allocation1 + $0x18] sm:$0xff pattern:$0x75316420]
    %v359 = vrot.slane %v220, 4
    %v360 = vrot.slane %v221, 4
    %v361 = vrot.slane %v222, 4
    %v362 = vrot.slane %v223, 4
    %v371 = vrot.slane %v284, 4
    %v372 = vrot.slane %v285, 4
    %v373 = vrot.slane %v286, 4
    %v374 = vrot.slane %v287, 4
    %vm379 = vcmask 1043456
    %v380 = vsel %vm379, %v92, %v324
    %v381 = vsel %vm379, %v93, %v325
    %v382 = vsel %vm379, %v94, %v326
    %v383 = vsel %vm379, %v95, %v327
    %v384 = vsel %vm379, %v156, %v336
    %v385 = vsel %vm379, %v157, %v337
    %v386 = vsel %vm379, %v158, %v338
    %v387 = vsel %vm379, %v159, %v339
    %v388 = vsel %vm379, %v347, %v359
    %v389 = vsel %vm379, %v348, %v360
    %v390 = vsel %vm379, %v349, %v361
    %v391 = vsel %vm379, %v350, %v362
    %v392 = vsel %vm379, %v252, %v371
    %v393 = vsel %vm379, %v253, %v372
    %v394 = vsel %vm379, %v254, %v373
    %v395 = vsel %vm379, %v255, %v374
    %v396 = vld [vmem:[#allocation5] sm:$0xff]
    %v397 = vld [vmem:[#allocation5 + $0x8] sm:$0xff]
    %v398 = vld [vmem:[%s3] sm:$0xff]
    %v399 = vld [vmem:[%s3 + $0x8] sm:$0xff]
    %401 = vset.pattern.permute.xlu0 0
    %402 = vperm.xlu0 %401, %v398
    %v403 = vpop.permute.xlu0 %402
    %406 = vset.pattern.permute.xlu0 0
    %407 = vperm.xlu0 %406, %v399
    %v408 = vpop.permute.xlu0 %407
    %vm410 = vcmask 293888
    %v412 = vsel %vm410, %v396, 0
    %v415 = vsel %vm410, %v397, 0
    %v418 = vsel %vm379, %v316, 0
    %v421 = vsel %vm379, %v317, 0
    %v424 = vsel %vm379, %v318, 0
    %v427 = vsel %vm379, %v319, 0
    %429 = vmatpush.msra.mxu0 0.0
    %430 = vmatpush.msra.mxu0 0.0
    %431 = vmatpush.msra.mxu0 0.0
    %432 = vmatpush.msra.mxu0 0.0
    %433 = vmatpush.msra.mxu0 0.0
    %434 = vmatpush.msra.mxu0 0.0
    %435 = vmatpush.msra.mxu0 0.0
    %436 = vmatpush.msra.mxu0 0.0
    %437 = vmatpush.msra.mxu0 0.0
    %438 = vmatpush.msra.mxu0 0.0
    %439 = vmatpush.msra.mxu0 0.0
    %440 = vmatpush.msra.mxu0 %v418
    %441 = vmatpush.msra.mxu0 %v392
    %442 = vmatpush.msra.mxu0 %v388
    %443 = vmatpush.msra.mxu0 %v384
    %444 = vmatpush.msra.mxu0 %v380
    %445 = vmatmul.f32.gmra.mxu0 %v412
    %v446 = vpop.f32.mrf.mxu0
    %v447 = vadd.f32 %v403, %v446
    %448 = vmatmul.f32.gmra.mxu0 %v415
    %v449 = vpop.f32.mrf.mxu0
    %v450 = vadd.f32 %v408, %v449
    %451 = vdwg.mxu0
    %452 = vmatpush.msra.mxu0 0.0
    %453 = vmatpush.msra.mxu0 0.0
    %454 = vmatpush.msra.mxu0 0.0
    %455 = vmatpush.msra.mxu0 0.0
    %456 = vmatpush.msra.mxu0 0.0
    %457 = vmatpush.msra.mxu0 0.0
    %458 = vmatpush.msra.mxu0 0.0
    %459 = vmatpush.msra.mxu0 0.0
    %460 = vmatpush.msra.mxu0 0.0
    %461 = vmatpush.msra.mxu0 0.0
    %462 = vmatpush.msra.mxu0 0.0
    %463 = vmatpush.msra.mxu0 %v421
    %464 = vmatpush.msra.mxu0 %v393
    %465 = vmatpush.msra.mxu0 %v389
    %466 = vmatpush.msra.mxu0 %v385
    %467 = vmatpush.msra.mxu0 %v381
    %468 = vmatmul.f32.gmra.mxu0 %v412
    %v469 = vpop.f32.mrf.mxu0
    %v470 = vadd.f32 %v403, %v469
    %471 = vmatmul.f32.gmra.mxu0 %v415
    %v472 = vpop.f32.mrf.mxu0
    %v473 = vadd.f32 %v408, %v472
    %474 = vdwg.mxu0
    %475 = vmatpush.msra.mxu0 0.0
    %476 = vmatpush.msra.mxu0 0.0
    %477 = vmatpush.msra.mxu0 0.0
    %478 = vmatpush.msra.mxu0 0.0
    %479 = vmatpush.msra.mxu0 0.0
    %480 = vmatpush.msra.mxu0 0.0
    %481 = vmatpush.msra.mxu0 0.0
    %482 = vmatpush.msra.mxu0 0.0
    %483 = vmatpush.msra.mxu0 0.0
    %484 = vmatpush.msra.mxu0 0.0
    %485 = vmatpush.msra.mxu0 0.0
    %486 = vmatpush.msra.mxu0 %v424
    %487 = vmatpush.msra.mxu0 %v394
    %488 = vmatpush.msra.mxu0 %v390
    %489 = vmatpush.msra.mxu0 %v386
    %490 = vmatpush.msra.mxu0 %v382
    %491 = vmatmul.f32.gmra.mxu0 %v412
    %v492 = vpop.f32.mrf.mxu0
    %v493 = vadd.f32 %v403, %v492
    %494 = vmatmul.f32.gmra.mxu0 %v415
    %v495 = vpop.f32.mrf.mxu0
    %v496 = vadd.f32 %v408, %v495
    %497 = vdwg.mxu0
    %498 = vmatpush.msra.mxu0 0.0
    %499 = vmatpush.msra.mxu0 0.0
    %500 = vmatpush.msra.mxu0 0.0
    %501 = vmatpush.msra.mxu0 0.0
    %502 = vmatpush.msra.mxu0 0.0
    %503 = vmatpush.msra.mxu0 0.0
    %504 = vmatpush.msra.mxu0 0.0
    %505 = vmatpush.msra.mxu0 0.0
    %506 = vmatpush.msra.mxu0 0.0
    %507 = vmatpush.msra.mxu0 0.0
    %508 = vmatpush.msra.mxu0 0.0
    %509 = vmatpush.msra.mxu0 %v427
    %510 = vmatpush.msra.mxu0 %v395
    %511 = vmatpush.msra.mxu0 %v391
    %512 = vmatpush.msra.mxu0 %v387
    %513 = vmatpush.msra.mxu0 %v383
    %514 = vmatmul.f32.gmra.mxu0 %v412
    %v515 = vpop.f32.mrf.mxu0
    %v516 = vadd.f32 %v403, %v515
    %517 = vmatmul.f32.gmra.mxu0 %v415
    %v518 = vpop.f32.mrf.mxu0
    %v519 = vadd.f32 %v408, %v518
    %520 = vdwg.mxu0
    %v521 = vxor.u32 %v447, 2147483648
    %v522 = vxor.u32 %v470, 2147483648
    %v523 = vxor.u32 %v493, 2147483648
    %v524 = vxor.u32 %v516, 2147483648
    %v525 = vmul.f32 %v521, 1.442695
    %v526 = vpow.pop %v525
    %v527 = vmul.f32 %v522, 1.442695
    %v528 = vpow.pop %v527
    %v529 = vmul.f32 %v523, 1.442695
    %v530 = vpow.pop %v529
    %v531 = vmul.f32 %v524, 1.442695
    %v532 = vpow.pop %v531
    %v533 = vadd.f32 %v526, 1.0
    %v534 = vadd.f32 %v528, 1.0
    %v535 = vadd.f32 %v530, 1.0
    %v536 = vadd.f32 %v532, 1.0
    %v537 = vrcp.pop %v533
    %v538 = vmul.f32 %v533, %v537
    %v539 = vsub.f32 1.0, %v538
    %v540 = vmul.f32 %v537, %v539
    %v541 = vadd.f32 %v537, %v540
    %vm542 = vweird.f32 %v533
    %vm543 = vweird.f32 %v537
    %vm544 = vmor %vm542, %vm543
    %v545 = vsel %vm544, %v537, %v541
    %v546 = vand.u32 2147483647, %v533
    %vm547 = vcmp.eq.f32.partialorder %v546, 8.507059e+37
    %v548 = vand.u32 %v533, 2147483648
    %v549 = vor.u32 1.1754944e-38, %v548
    %v550 = vsel %vm547, %v549, %v545
    %v551 = vmul.f32 1.0, %v550
    %v552 = vrcp.pop %v534
    %v553 = vmul.f32 %v534, %v552
    %v554 = vsub.f32 1.0, %v553
    %v555 = vmul.f32 %v552, %v554
    %v556 = vadd.f32 %v552, %v555
    %vm557 = vweird.f32 %v534
    %vm558 = vweird.f32 %v552
    %vm559 = vmor %vm557, %vm558
    %v560 = vsel %vm559, %v552, %v556
    %v561 = vand.u32 2147483647, %v534
    %vm562 = vcmp.eq.f32.partialorder %v561, 8.507059e+37
    %v563 = vand.u32 %v534, 2147483648
    %v564 = vor.u32 1.1754944e-38, %v563
    %v565 = vsel %vm562, %v564, %v560
    %v566 = vmul.f32 1.0, %v565
    %v567 = vrcp.pop %v535
    %v568 = vmul.f32 %v535, %v567
    %v569 = vsub.f32 1.0, %v568
    %v570 = vmul.f32 %v567, %v569
    %v571 = vadd.f32 %v567, %v570
    %vm572 = vweird.f32 %v535
    %vm573 = vweird.f32 %v567
    %vm574 = vmor %vm572, %vm573
    %v575 = vsel %vm574, %v567, %v571
    %v576 = vand.u32 2147483647, %v535
    %vm577 = vcmp.eq.f32.partialorder %v576, 8.507059e+37
    %v578 = vand.u32 %v535, 2147483648
    %v579 = vor.u32 1.1754944e-38, %v578
    %v580 = vsel %vm577, %v579, %v575
    %v581 = vmul.f32 1.0, %v580
    %v582 = vrcp.pop %v536
    %v583 = vmul.f32 %v536, %v582
    %v584 = vsub.f32 1.0, %v583
    %v585 = vmul.f32 %v582, %v584
    %v586 = vadd.f32 %v582, %v585
    %vm587 = vweird.f32 %v536
    %vm588 = vweird.f32 %v582
    %vm589 = vmor %vm587, %vm588
    %v590 = vsel %vm589, %v582, %v586
    %v591 = vand.u32 2147483647, %v536
    %vm592 = vcmp.eq.f32.partialorder %v591, 8.507059e+37
    %v593 = vand.u32 %v536, 2147483648
    %v594 = vor.u32 1.1754944e-38, %v593
    %v595 = vsel %vm592, %v594, %v590
    %v596 = vmul.f32 1.0, %v595
    %v597 = vtanh.pop %v450
    %v598 = vtanh.pop %v473
    %v599 = vtanh.pop %v496
    %v600 = vtanh.pop %v519
    %v601 = vmul.f32 %v551, %v597
    %v602 = vmul.f32 %v566, %v598
    %v603 = vmul.f32 %v581, %v599
    %v604 = vmul.f32 %v596, %v600
    %605 = vst [vmem:[#allocation7] sm:$0xff] %v601
    %606 = vst [vmem:[#allocation7 + $0x8] sm:$0xff] %v602
    %607 = vst [vmem:[#allocation7 + $0x10] sm:$0xff] %v603
    %608 = vst [vmem:[#allocation7 + $0x18] sm:$0xff] %v604
    // Predicated region
    $region26: #{tpu_custom_call.1} parent=1 // pred_check
      _
    $region27: #{tpu_custom_call.1} parent=1 // pred_check_branch
      %610 = sbr.rel (0) target = $region29
    $region28: #{tpu_custom_call.1} parent=1 // pred_region
      %612 = vsyncadd [#allocation4], 0
      %s614 = sshll.u32 [#allocation7], 4
      %s615 = int_to_ptr.vmem [resolvable:$true] %s614
      %s616 = sshll.u32 %s4, 4
      %s617 = int_to_ptr.hbm [resolvable:$true] %s616
      %619 = dma.vmem_to_hbm [thread:$0]  %s615, 512, %s617, [#allocation4]
    $region29: #{tpu_custom_call.1} parent=1 // pred_fallthru
      _
    // Predicated region
    $region30: #{tpu_custom_call.1} parent=1 // pred_check
      _
    $region31: #{tpu_custom_call.1} parent=1 // pred_check_branch
      %621 = sbr.rel (0) target = $region33
    $region32: #{tpu_custom_call.1} parent=1 // pred_region
      %623 = dma.done [#allocation4], 512
    $region33: #{tpu_custom_call.1} parent=1 // pred_fallthru
      _
    %624 = vsyncpa [#allocation3], 1
    %625 = vsyncpa [#allocation6], 1
    %626 = vsyncpa [#allocation4], 1

</llo_original>
